<compile_context>
chip_gen: v5e
topology: v5e:2x2
jax: 0.10.0
libtpu: 0.0.40
codegen_flags: <defaults>
</compile_context>

<pallas_src>
import jax
import jax.numpy as jnp
from jax import lax
from jax.experimental import pallas as pl
from jax.experimental.pallas import tpu as pltpu

ALPHA = 0.75
TEMPERATURE = 0.1
INV_T = 1.0 / TEMPERATURE
COS_EPS = 1e-8  # torch.nn.CosineSimilarity default eps


def _convirt_kernel(zi_ref, zt_ref, rowlog_ref, diag_ref, colpart_ref,
                    row_acc, zi_norm_ref):
    """One (row-block i, col-block j) tile of the similarity matrix."""
    i = pl.program_id(0)
    j = pl.program_id(1)
    nj = pl.num_programs(1)

    # z_text (column) block changes every j: normalize it per tile.
    zt = zt_ref[...].astype(jnp.float32)  # (TN, D)
    inv_t = 1.0 / jnp.maximum(
        jnp.sqrt(jnp.sum(zt * zt, axis=1, keepdims=True)), COS_EPS)
    zt_n = (zt * inv_t).astype(zt_ref.dtype)  # (TN, D), MXU operand dtype

    # z_img (row) block is constant across the j sweep: normalize once at
    # j == 0, cache in VMEM scratch, reuse for all column tiles.
    @pl.when(j == 0)
    def _():
        zi = zi_ref[...].astype(jnp.float32)  # (TM, D)
        inv_i = 1.0 / jnp.maximum(
            jnp.sqrt(jnp.sum(zi * zi, axis=1, keepdims=True)), COS_EPS)
        zi_norm_ref[...] = (zi * inv_i).astype(zi_norm_ref.dtype)
        row_acc[...] = jnp.zeros_like(row_acc)

    zi_n = zi_norm_ref[...]  # (TM, D)

    # Cosine tile on the MXU (input dtype operands, f32 accumulation).
    cos = lax.dot_general(
        zi_n, zt_n, (((1,), (1,)), ((), ())),
        preferred_element_type=jnp.float32)  # (TM, TN)

    # exp of the shifted logits: sim - 1/T = (cos - 1)/T <= 0 => exp in (0, 1],
    # overflow-proof for any temperature.  Shift is undone in the wrapper.
    e = jnp.exp((cos - 1.0) * INV_T)  # (TM, TN)

    # Running row sums (denominator of NT_Xent(z_img, z_text)): lane reduce
    # (XLU slot, leaves the MXU free).
    row_acc[...] += jnp.sum(e, axis=1, keepdims=True)  # (TM, 1)

    # Partial column sums via ones(1,TM) @ e on the MXU (no full cross-sublane
    # reduce).  Each (i, j) writes its own lane-dense tile; wrapper sums over i.
    ones_row = jnp.ones((1, e.shape[0]), jnp.float32)
    colpart = lax.dot_general(
        ones_row, e, (((1,), (0,)), ((), ())),
        preferred_element_type=jnp.float32)  # (1, TN)
    colpart_ref[...] = colpart.reshape(colpart_ref.shape)

    # Diagonal of the global similarity matrix lives in the j == i tile
    # (TM == TN).  Computed once per row block; serves both loss directions.
    @pl.when(j == i)
    def _():
        diag_ref[...] = (jnp.sum(
            zi_n.astype(jnp.float32) * zt_n.astype(jnp.float32),
            axis=1, keepdims=True) * INV_T)  # (TM, 1)

    # Finalize log of the (shifted) row sums after the last column tile.
    @pl.when(j == nj - 1)
    def _():
        rowlog_ref[...] = jnp.log(row_acc[...])


def convirt_loss(z_img, z_text, block=None):
    """alpha*NT_Xent(z_img, z_text) + (1-alpha)*NT_Xent(z_text, z_img), world_size=1."""
    n, d = z_img.shape
    assert z_text.shape == (n, d)
    if block is None:
        block = min(128, n)
    assert n % block == 0, "batch size must be divisible by the row/col block"
    g = n // block

    rowlog, diag, colpart = pl.pallas_call(
        _convirt_kernel,
        out_shape=(
            jax.ShapeDtypeStruct((n, 1), jnp.float32),            # log(sum exp(sim - 1/T)) per row
            jax.ShapeDtypeStruct((n, 1), jnp.float32),            # diag(sim) = cos(zi_r, zt_r)/T
            jax.ShapeDtypeStruct((g, g, 1, block), jnp.float32),  # per-(i,j) partial column sums
        ),
        grid_spec=pltpu.PrefetchScalarGridSpec(
            num_scalar_prefetch=0,
            grid=(g, g),
            in_specs=[
                pl.BlockSpec((block, d), lambda i, j: (i, 0)),    # z_img rows
                pl.BlockSpec((block, d), lambda i, j: (j, 0)),    # z_text rows (sim columns)
            ],
            out_specs=[
                pl.BlockSpec((block, 1), lambda i, j: (i, 0)),
                pl.BlockSpec((block, 1), lambda i, j: (i, 0)),
                pl.BlockSpec((1, 1, 1, block), lambda i, j: (i, j, 0, 0)),
            ],
            scratch_shapes=[
                pltpu.VMEM((block, 1), jnp.float32),   # running row sums
                pltpu.VMEM((block, d), z_img.dtype),   # cached normalized z_img rows
            ],
        ),
        compiler_params=pltpu.CompilerParams(
            dimension_semantics=("parallel", "arbitrary")),
    )(z_img, z_text)

    # Tiny finalization in plain JAX (keeps the parallel row axis race-free).
    row_log = rowlog[:, 0] + INV_T                      # undo the exp shift
    diag_v = diag[:, 0]
    col_sum = jnp.sum(colpart.reshape(g, n), axis=0)    # (N,)
    col_log = jnp.log(col_sum) + INV_T

    loss_a = jnp.mean(row_log - diag_v)                 # NT_Xent(z_img, z_text)
    loss_b = jnp.mean(col_log - diag_v)                 # NT_Xent(z_text, z_img)
    return ALPHA * loss_a + (1.0 - ALPHA) * loss_b


def convirt_loss_ref(z_img, z_text):
    """Pure-JAX reference mirroring the PyTorch module (world_size=1)."""
    def nt_xent(zi, zj):
        n = zi.shape[0]
        num = jnp.sum(zi[:, None, :] * zj[None, :, :], axis=2)
        den = jnp.maximum(
            jnp.linalg.norm(zi, axis=1)[:, None] * jnp.linalg.norm(zj, axis=1)[None, :],
            COS_EPS,
        )
        sim = num / den / TEMPERATURE
        nom = jnp.exp(jnp.diag(sim))
        denom = jnp.sum(jnp.exp(sim), axis=1)
        return jnp.sum(-jnp.log(nom / denom)) / n

    return ALPHA * nt_xent(z_img, z_text) + (1.0 - ALPHA) * nt_xent(z_text, z_img)


if __name__ == "__main__":
    key = jax.random.PRNGKey(0)
    k1, k2 = jax.random.split(key)
    batch_size, hidden = 16, 32  # N = batch_size * world_size, world_size = 1
    z_img = jax.random.normal(k1, (batch_size, hidden), dtype=jnp.float32)
    z_text = jax.random.normal(k2, (batch_size, hidden), dtype=jnp.float32)

    ref = convirt_loss_ref(z_img, z_text)

    # 2x2 grid: exercises row-sum accumulation, cached-row reuse across j,
    # the j==i diagonal tile, and the per-(i,j) column partials.
    loss_tiled = convirt_loss(z_img, z_text, block=8)
    jax.block_until_ready(loss_tiled)
    assert jnp.allclose(loss_tiled, ref, rtol=1e-4, atol=1e-4), (loss_tiled, ref)

    # Single-tile path (default block = min(128, N)).
    loss_single = convirt_loss(z_img, z_text)
    jax.block_until_ready(loss_single)
    assert jnp.allclose(loss_single, ref, rtol=1e-4, atol=1e-4), (loss_single, ref)

    print("KERNEL_OK")
</pallas_src>

<mosaic_0001>
module attributes {stable_mosaic.version = 11 : i64} {
  func.func @_convirt_kernel(%arg0: i32, %arg1: i32, %arg2: memref<8x32xf32, #tpu.memory_space<vmem>>, %arg3: memref<8x32xf32, #tpu.memory_space<vmem>>, %arg4: memref<8x1xf32, #tpu.memory_space<vmem>>, %arg5: memref<8x1xf32, #tpu.memory_space<vmem>>, %arg6: memref<1x1x1x8xf32, #tpu.memory_space<vmem>>, %arg7: memref<8x1xf32, #tpu.memory_space<vmem>>, %arg8: memref<8x32xf32, #tpu.memory_space<vmem>>) attributes {dimension_semantics = [#tpu.dimension_semantics<parallel>, #tpu.dimension_semantics<arbitrary>], iteration_bounds = array<i64: 2, 2>, scalar_prefetch = 0 : i64, scratch_operands = 2 : i64, tpu.core_type = #tpu.core_type<tc>, window_params = [{transform_indices = @transform_0, window_bounds = array<i64: 8, 32>}, {transform_indices = @transform_1, window_bounds = array<i64: 8, 32>}, {transform_indices = @transform_2, window_bounds = array<i64: 8, 1>}, {transform_indices = @transform_3, window_bounds = array<i64: 8, 1>}, {transform_indices = @transform_4, window_bounds = array<i64: 1, 1, 1, 8>}]} {
    %c0 = arith.constant 0 : index
    %c0_0 = arith.constant 0 : index
    %0 = vector.load %arg3[%c0, %c0_0] : memref<8x32xf32, #tpu.memory_space<vmem>>, vector<8x32xf32>
    %1 = arith.mulf %0, %0 : vector<8x32xf32>
    %cst = arith.constant dense<0.000000e+00> : vector<8xf32>
    %2 = vector.multi_reduction <add>, %1, %cst [1] : vector<8x32xf32> to vector<8xf32>
    %3 = vector.shape_cast %2 : vector<8xf32> to vector<8x1xf32>
    %4 = math.sqrt %3 : vector<8x1xf32>
    %cst_1 = arith.constant 9.99999993E-9 : f32
    %5 = vector.broadcast %cst_1 : f32 to vector<8x1xf32>
    %6 = arith.maximumf %4, %5 : vector<8x1xf32>
    %cst_2 = arith.constant 1.000000e+00 : f32
    %7 = vector.broadcast %cst_2 : f32 to vector<8x1xf32>
    %8 = arith.divf %7, %6 : vector<8x1xf32>
    %9 = vector.broadcast %8 : vector<8x1xf32> to vector<8x32xf32>
    %10 = arith.mulf %0, %9 : vector<8x32xf32>
    %c0_i32 = arith.constant 0 : i32
    %11 = arith.cmpi eq, %arg1, %c0_i32 : i32
    %12 = arith.extui %11 : i1 to i32
    %c0_i32_3 = arith.constant 0 : i32
    %13 = arith.cmpi ne, %12, %c0_i32_3 : i32
    scf.if %13 {
      %c0_22 = arith.constant 0 : index
      %c0_23 = arith.constant 0 : index
      %36 = vector.load %arg2[%c0_22, %c0_23] : memref<8x32xf32, #tpu.memory_space<vmem>>, vector<8x32xf32>
      %37 = arith.mulf %36, %36 : vector<8x32xf32>
      %cst_24 = arith.constant dense<0.000000e+00> : vector<8xf32>
      %38 = vector.multi_reduction <add>, %37, %cst_24 [1] : vector<8x32xf32> to vector<8xf32>
      %39 = vector.shape_cast %38 : vector<8xf32> to vector<8x1xf32>
      %40 = math.sqrt %39 : vector<8x1xf32>
      %cst_25 = arith.constant 9.99999993E-9 : f32
      %41 = vector.broadcast %cst_25 : f32 to vector<8x1xf32>
      %42 = arith.maximumf %40, %41 : vector<8x1xf32>
      %cst_26 = arith.constant 1.000000e+00 : f32
      %43 = vector.broadcast %cst_26 : f32 to vector<8x1xf32>
      %44 = arith.divf %43, %42 : vector<8x1xf32>
      %45 = vector.broadcast %44 : vector<8x1xf32> to vector<8x32xf32>
      %46 = arith.mulf %36, %45 : vector<8x32xf32>
      %c0_27 = arith.constant 0 : index
      %c0_28 = arith.constant 0 : index
      %47 = vector.load %arg8[%c0_27, %c0_28] : memref<8x32xf32, #tpu.memory_space<vmem>>, vector<8x32xf32>
      tpu.vector_store %arg8[%c0_27, %c0_28], %46 {strides = array<i32>} : memref<8x32xf32, #tpu.memory_space<vmem>>, vector<8x32xf32>,
      %cst_29 = arith.constant 0.000000e+00 : f32
      %48 = vector.broadcast %cst_29 : f32 to vector<8x1xf32>
      %c0_30 = arith.constant 0 : index
      %c0_31 = arith.constant 0 : index
      %49 = vector.load %arg7[%c0_30, %c0_31] : memref<8x1xf32, #tpu.memory_space<vmem>>, vector<8x1xf32>
      tpu.vector_store %arg7[%c0_30, %c0_31], %48 {strides = array<i32>} : memref<8x1xf32, #tpu.memory_space<vmem>>, vector<8x1xf32>,
    } else {
    }
    %c0_4 = arith.constant 0 : index
    %c0_5 = arith.constant 0 : index
    %14 = vector.load %arg8[%c0_4, %c0_5] : memref<8x32xf32, #tpu.memory_space<vmem>>, vector<8x32xf32>
    %cst_6 = arith.constant dense<0.000000e+00> : vector<8x8xf32>
    %15 = tpu.matmul %14, %10, %cst_6 {dimension_numbers = #tpu.dot_dimension_numbers<[1], [1], [0], [0], [0, 0, 1, 0], [], []>} : vector<8x32xf32>, vector<8x32xf32>, vector<8x8xf32> -> vector<8x8xf32>
    %cst_7 = arith.constant 1.000000e+00 : f32
    %16 = vector.broadcast %cst_7 : f32 to vector<8x8xf32>
    %17 = arith.subf %15, %16 : vector<8x8xf32>
    %cst_8 = arith.constant 1.000000e+01 : f32
    %18 = vector.broadcast %cst_8 : f32 to vector<8x8xf32>
    %19 = arith.mulf %17, %18 : vector<8x8xf32>
    %20 = math.exp %19 : vector<8x8xf32>
    %c0_9 = arith.constant 0 : index
    %c0_10 = arith.constant 0 : index
    %21 = vector.load %arg7[%c0_9, %c0_10] : memref<8x1xf32, #tpu.memory_space<vmem>>, vector<8x1xf32>
    %cst_11 = arith.constant dense<0.000000e+00> : vector<8xf32>
    %22 = vector.multi_reduction <add>, %20, %cst_11 [1] : vector<8x8xf32> to vector<8xf32>
    %23 = vector.shape_cast %22 : vector<8xf32> to vector<8x1xf32>
    %24 = arith.addf %21, %23 : vector<8x1xf32>
    %c0_12 = arith.constant 0 : index
    %c0_13 = arith.constant 0 : index
    %25 = vector.load %arg7[%c0_12, %c0_13] : memref<8x1xf32, #tpu.memory_space<vmem>>, vector<8x1xf32>
    tpu.vector_store %arg7[%c0_12, %c0_13], %24 {strides = array<i32>} : memref<8x1xf32, #tpu.memory_space<vmem>>, vector<8x1xf32>,
    %cst_14 = arith.constant 1.000000e+00 : f32
    %26 = vector.broadcast %cst_14 : f32 to vector<1x8xf32>
    %cst_15 = arith.constant dense<0.000000e+00> : vector<1x8xf32>
    %27 = tpu.matmul %26, %20, %cst_15 {dimension_numbers = #tpu.dot_dimension_numbers<[1], [0], [0], [1], [0, 0, 1, 1], [], []>} : vector<1x8xf32>, vector<8x8xf32>, vector<1x8xf32> -> vector<1x8xf32>
    %28 = vector.shape_cast %27 : vector<1x8xf32> to vector<1x1x1x8xf32>
    %c0_16 = arith.constant 0 : index
    %c0_17 = arith.constant 0 : index
    %c0_18 = arith.constant 0 : index
    %c0_19 = arith.constant 0 : index
    %29 = vector.load %arg6[%c0_16, %c0_17, %c0_18, %c0_19] : memref<1x1x1x8xf32, #tpu.memory_space<vmem>>, vector<1x1x1x8xf32>
    tpu.vector_store %arg6[%c0_16, %c0_17, %c0_18, %c0_19], %28 {strides = array<i32>} : memref<1x1x1x8xf32, #tpu.memory_space<vmem>>, vector<1x1x1x8xf32>,
    %30 = arith.cmpi eq, %arg1, %arg0 : i32
    %31 = arith.extui %30 : i1 to i32
    %c0_i32_20 = arith.constant 0 : i32
    %32 = arith.cmpi ne, %31, %c0_i32_20 : i32
    scf.if %32 {
      %36 = arith.mulf %14, %10 : vector<8x32xf32>
      %cst_22 = arith.constant dense<0.000000e+00> : vector<8xf32>
      %37 = vector.multi_reduction <add>, %36, %cst_22 [1] : vector<8x32xf32> to vector<8xf32>
      %38 = vector.shape_cast %37 : vector<8xf32> to vector<8x1xf32>
      %cst_23 = arith.constant 1.000000e+01 : f32
      %39 = vector.broadcast %cst_23 : f32 to vector<8x1xf32>
      %40 = arith.mulf %38, %39 : vector<8x1xf32>
      %c0_24 = arith.constant 0 : index
      %c0_25 = arith.constant 0 : index
      %41 = vector.load %arg5[%c0_24, %c0_25] : memref<8x1xf32, #tpu.memory_space<vmem>>, vector<8x1xf32>
      tpu.vector_store %arg5[%c0_24, %c0_25], %40 {strides = array<i32>} : memref<8x1xf32, #tpu.memory_space<vmem>>, vector<8x1xf32>,
    } else {
    }
    %c1_i32 = arith.constant 1 : i32
    %33 = arith.cmpi eq, %arg1, %c1_i32 : i32
    %34 = arith.extui %33 : i1 to i32
    %c0_i32_21 = arith.constant 0 : i32
    %35 = arith.cmpi ne, %34, %c0_i32_21 : i32
    scf.if %35 {
      %c0_22 = arith.constant 0 : index
      %c0_23 = arith.constant 0 : index
      %36 = vector.load %arg7[%c0_22, %c0_23] : memref<8x1xf32, #tpu.memory_space<vmem>>, vector<8x1xf32>
      %37 = math.log %36 : vector<8x1xf32>
      %c0_24 = arith.constant 0 : index
      %c0_25 = arith.constant 0 : index
      %38 = vector.load %arg4[%c0_24, %c0_25] : memref<8x1xf32, #tpu.memory_space<vmem>>, vector<8x1xf32>
      tpu.vector_store %arg4[%c0_24, %c0_25], %37 {strides = array<i32>} : memref<8x1xf32, #tpu.memory_space<vmem>>, vector<8x1xf32>,
    } else {
    }
    return
  }
  func.func @transform_0(%arg0: i32, %arg1: i32) -> (i32, i32) {
    %c0_i32 = arith.constant 0 : i32
    %c0_i32_0 = arith.constant 0 : i32
    return %arg0, %c0_i32 : i32, i32
  }
  func.func @transform_1(%arg0: i32, %arg1: i32) -> (i32, i32) {
    %c0_i32 = arith.constant 0 : i32
    %c0_i32_0 = arith.constant 0 : i32
    return %arg1, %c0_i32 : i32, i32
  }
  func.func @transform_2(%arg0: i32, %arg1: i32) -> (i32, i32) {
    %c0_i32 = arith.constant 0 : i32
    %c0_i32_0 = arith.constant 0 : i32
    return %arg0, %c0_i32 : i32, i32
  }
  func.func @transform_3(%arg0: i32, %arg1: i32) -> (i32, i32) {
    %c0_i32 = arith.constant 0 : i32
    %c0_i32_0 = arith.constant 0 : i32
    return %arg0, %c0_i32 : i32, i32
  }
  func.func @transform_4(%arg0: i32, %arg1: i32) -> (i32, i32, i32, i32) {
    %c0_i32 = arith.constant 0 : i32
    %c0_i32_0 = arith.constant 0 : i32
    %c0_i32_1 = arith.constant 0 : i32
    return %arg0, %arg1, %c0_i32, %c0_i32_0 : i32, i32, i32, i32
  }
}

</mosaic_0001>

<llo_original>
// kernel: tpu_custom_call.1
$region0: #{tpu_custom_call.1}
  #allocation0 [shape = 'u32[]', space=smem, size = 0x4, offset = 0x4, fixed_abs, tag = 'smem constant byte address 0x4 - core index']
  #allocation1 [shape = 'u32[72,128]{1,0:T(1,128)}', space=vmem, size = 0x9000, scoped, tag = 'internal scratch']
  #allocation2 [shape = 'f32[8,1]{1,0:T(8,128)}', space=vmem, size = 0x1000, scoped, tag = 'scratch operand']
  #allocation3 [shape = 'f32[8,32]{1,0:T(8,128)}', space=vmem, size = 0x1000, scoped, tag = 'scratch operand']
  %s0 = inlined_call_operand.hbm [shape: f32[16,32], index: 0, kind: input, shape index: {}]
  %s1 = inlined_call_operand.hbm [shape: f32[16,32], index: 1, kind: input, shape index: {}]
  %s2 = inlined_call_operand.vmem [shape: f32[16,1], index: 2, kind: output, shape index: {0}]
  %s3 = inlined_call_operand.vmem [shape: f32[16,1], index: 3, kind: output, shape index: {1}]
  %s4 = inlined_call_operand.hbm [shape: f32[2,2,1,8], index: 4, kind: output, shape index: {2}]
  %5 = xla_tuple %s2, %s3, %s4
  %s6 = sld [smem:[#allocation0]]
  $region77: #{tpu_custom_call.1} parent=0
    _
  %s8 = ssub.s32 1, %s6
  %s9 = scalar_select 0, %s8, %s6
  $region1: #{tpu_custom_call.1} parent=0
    #allocation4 [shape = 'u8[8192]{0}', space=vmem, size = 0x2000, scoped, tag = 'input window, operand 0']
    #allocation5 [shape = 's32[2]{0}', space=sflag, size = 0x8, scoped, tag = 'scoped memory for tpu_custom_call.1']
    #allocation6 [shape = 's32[2]{0}', space=sflag, size = 0x8, scoped, tag = 'scoped memory for tpu_custom_call.1']
    #allocation7 [shape = 'u8[8192]{0}', space=vmem, size = 0x2000, scoped, tag = 'input window, operand 1']
    #allocation8 [shape = 's32[2]{0}', space=sflag, size = 0x8, scoped, tag = 'scoped memory for tpu_custom_call.1']
    #allocation9 [shape = 'u8[1024]{0}', space=vmem, size = 0x400, scoped, tag = 'output window, operand 2']
    %10 = vsyncpa [#allocation5], 0
    %s11 = scalar_lea.sflag [#allocation5], 1
    %12 = vsyncpa %s11, 0
    %13 = vsyncpa [#allocation8], 0
    %s14 = scalar_lea.sflag [#allocation8], 1
    %15 = vsyncpa %s14, 0
    %16 = vsyncpa [#allocation6], 0
    %s17 = scalar_lea.sflag [#allocation6], 1
    %18 = vsyncpa %s17, 0
    loop: start=0, step=1, limit=6
    $region2: #{tpu_custom_call.1} parent=1 // loop_pre_header
      _
    $region3: #{tpu_custom_call.1} parent=1 // loop_header
      %s20 = sphi 0, %s24
      %p21 = scmp.ge.s32.totalorder %s20, 6
      %s27 = sphi 0, %s39
      %s28 = sphi 0, %s35
      %s29 = sphi 0, %s27
      %s30 = sphi 0, %s28
      %s31 = sphi 0, %s29
      %s32 = sphi 0, %s30
      %s42 = sphi 0, %s44
      %s45 = sphi 0, %s42
      %s46 = sphi 0, %s45
      %s62 = sphi 0, %s46
      %s68 = sphi 0, %s70
      %s71 = sphi 0, %s68
      %s72 = sphi 0, %s71
      %s88 = sphi 0, %s72
      %s94 = sphi 0, %s96
      %s97 = sphi 0, %s94
      %s98 = sphi 0, %s97
      %s114 = sphi 0, %s98
      %s120 = sphi 0, %s122
      %s123 = sphi 0, %s120
      %s124 = sphi 0, %s123
      %s140 = sphi 0, %s124
      %s148 = sphi 0, %s150
      %s151 = sphi 0, %s148
      %s152 = sphi 0, %s151
      %s168 = sphi 0, %s152
    $region4: #{tpu_custom_call.1} parent=1 // loop_header_branch
      %23 = sbr.rel (%p21) target = $region8
    $region5: #{tpu_custom_call.1} parent=1 // loop_body
      %s25 = ssub.s32 %s20, 1
      %s26 = ssub.s32 %s20, 2
      %s33 = sadd.s32 1, %s28
      %p34 = scmp.ge.s32.totalorder %s33, 2
      %s35 = scalar_select %p34, 0, %s33
      %s36 = sadd.s32 1, %s27
      %s37 = scalar_select %p34, %s36, %s27
      %p38 = scmp.ge.s32.totalorder %s37, 2
      %s39 = scalar_select %p38, 0, %s37
      %s40 = ssub.s32 %s27, %s39
      %p41 = scmp.eq.s32.totalorder %s40, 0
      %s43 = sadd.s32 %s42, 1
      %s44 = scalar_select %p41, %s42, %s43
      %p47 = pneg %p41
      %p48 = scmp.eq.s32.totalorder %s20, 3
      %p49 = por %p47, %p48
      %p50 = scmp.ne.s32.totalorder %s42, %s45
      %p51 = scmp.eq.s32.totalorder %s20, 0
      %p52 = por %p50, %p51
      %p53 = scmp.ne.s32.totalorder %s42, %s45
      %p54 = scmp.eq.s32.totalorder %s25, 3
      %p55 = por %p53, %p54
      %p56 = scmp.ne.s32.totalorder %s45, %s46
      %p57 = scmp.eq.s32.totalorder %s25, 0
      %p58 = por %p56, %p57
      %p59 = scmp.ne.s32.totalorder %s45, %s46
      %p60 = scmp.eq.s32.totalorder %s26, 3
      %p61 = por %p59, %p60
      %p63 = scmp.ne.s32.totalorder %s46, %s62
      %p64 = scmp.eq.s32.totalorder %s26, 0
      %p65 = por %p63, %p64
      %s66 = ssub.s32 %s28, %s35
      %p67 = scmp.eq.s32.totalorder %s66, 0
      %s69 = sadd.s32 %s68, 1
      %s70 = scalar_select %p67, %s68, %s69
      %p73 = pneg %p67
      %p74 = scmp.eq.s32.totalorder %s20, 3
      %p75 = por %p73, %p74
      %p76 = scmp.ne.s32.totalorder %s68, %s71
      %p77 = scmp.eq.s32.totalorder %s20, 0
      %p78 = por %p76, %p77
      %p79 = scmp.ne.s32.totalorder %s68, %s71
      %p80 = scmp.eq.s32.totalorder %s25, 3
      %p81 = por %p79, %p80
      %p82 = scmp.ne.s32.totalorder %s71, %s72
      %p83 = scmp.eq.s32.totalorder %s25, 0
      %p84 = por %p82, %p83
      %p85 = scmp.ne.s32.totalorder %s71, %s72
      %p86 = scmp.eq.s32.totalorder %s26, 3
      %p87 = por %p85, %p86
      %p89 = scmp.ne.s32.totalorder %s72, %s88
      %p90 = scmp.eq.s32.totalorder %s26, 0
      %p91 = por %p89, %p90
      %s92 = ssub.s32 %s27, %s39
      %p93 = scmp.eq.s32.totalorder %s92, 0
      %s95 = sadd.s32 %s94, 1
      %s96 = scalar_select %p93, %s94, %s95
      %p99 = pneg %p93
      %p100 = scmp.eq.s32.totalorder %s20, 3
      %p101 = por %p99, %p100
      %p102 = scmp.ne.s32.totalorder %s94, %s97
      %p103 = scmp.eq.s32.totalorder %s20, 0
      %p104 = por %p102, %p103
      %p105 = scmp.ne.s32.totalorder %s94, %s97
      %p106 = scmp.eq.s32.totalorder %s25, 3
      %p107 = por %p105, %p106
      %p108 = scmp.ne.s32.totalorder %s97, %s98
      %p109 = scmp.eq.s32.totalorder %s25, 0
      %p110 = por %p108, %p109
      %p111 = scmp.ne.s32.totalorder %s97, %s98
      %p112 = scmp.eq.s32.totalorder %s26, 3
      %p113 = por %p111, %p112
      %p115 = scmp.ne.s32.totalorder %s98, %s114
      %p116 = scmp.eq.s32.totalorder %s26, 0
      %p117 = por %p115, %p116
      %s118 = ssub.s32 %s27, %s39
      %p119 = scmp.eq.s32.totalorder %s118, 0
      %s121 = sadd.s32 %s120, 1
      %s122 = scalar_select %p119, %s120, %s121
      %p125 = pneg %p119
      %p126 = scmp.eq.s32.totalorder %s20, 3
      %p127 = por %p125, %p126
      %p128 = scmp.ne.s32.totalorder %s120, %s123
      %p129 = scmp.eq.s32.totalorder %s20, 0
      %p130 = por %p128, %p129
      %p131 = scmp.ne.s32.totalorder %s120, %s123
      %p132 = scmp.eq.s32.totalorder %s25, 3
      %p133 = por %p131, %p132
      %p134 = scmp.ne.s32.totalorder %s123, %s124
      %p135 = scmp.eq.s32.totalorder %s25, 0
      %p136 = por %p134, %p135
      %p137 = scmp.ne.s32.totalorder %s123, %s124
      %p138 = scmp.eq.s32.totalorder %s26, 3
      %p139 = por %p137, %p138
      %p141 = scmp.ne.s32.totalorder %s124, %s140
      %p142 = scmp.eq.s32.totalorder %s26, 0
      %p143 = por %p141, %p142
      %s144 = ssub.s32 %s27, %s39
      %s145 = ssub.s32 %s28, %s35
      %s146 = sor.u32 %s144, %s145
      %p147 = scmp.eq.s32.totalorder %s146, 0
      %s149 = sadd.s32 %s148, 1
      %s150 = scalar_select %p147, %s148, %s149
      %p153 = pneg %p147
      %p154 = scmp.eq.s32.totalorder %s20, 3
      %p155 = por %p153, %p154
      %p156 = scmp.ne.s32.totalorder %s148, %s151
      %p157 = scmp.eq.s32.totalorder %s20, 0
      %p158 = por %p156, %p157
      %p159 = scmp.ne.s32.totalorder %s148, %s151
      %p160 = scmp.eq.s32.totalorder %s25, 3
      %p161 = por %p159, %p160
      %p162 = scmp.ne.s32.totalorder %s151, %s152
      %p163 = scmp.eq.s32.totalorder %s25, 0
      %p164 = por %p162, %p163
      %p165 = scmp.ne.s32.totalorder %s151, %s152
      %p166 = scmp.eq.s32.totalorder %s26, 3
      %p167 = por %p165, %p166
      %p169 = scmp.ne.s32.totalorder %s152, %s168
      %p170 = scmp.eq.s32.totalorder %s26, 0
      %p171 = por %p169, %p170
      %p172 = scmp.le.s32.totalorder 1, %s20
      %p173 = scmp.lt.s32.totalorder %s20, 5
      %p174 = pnand %p172, %p173
      %p175 = pneg %p174
      // Predicated region
      $region9: #{tpu_custom_call.1} parent=5 // pred_check
        _
      $region10: #{tpu_custom_call.1} parent=5 // pred_check_branch
        %177 = sbr.rel (%p174) target = $region12
      $region11: #{tpu_custom_call.1} parent=5 // pred_region
        %s178 = ssub.s32 %s20, 1
      $region12: #{tpu_custom_call.1} parent=5 // pred_fallthru
        _
      %p179 = scmp.lt.s32.totalorder %s20, 4
      // Predicated region
      $region13: #{tpu_custom_call.1} parent=5 // pred_check
        %p180 = pneg %p179
      $region14: #{tpu_custom_call.1} parent=5 // pred_check_branch
        %182 = sbr.rel (%p180) target = $region16
      $region15: #{tpu_custom_call.1} parent=5 // pred_region
        // Predicated region
        $region17: #{tpu_custom_call.1} parent=15 // pred_check
          %p183 = pneg %p52
        $region18: #{tpu_custom_call.1} parent=15 // pred_check_branch
          %185 = sbr.rel (%p183) target = $region20
        $region19: #{tpu_custom_call.1} parent=15 // pred_region
          %s186 = sand.u32 %s42, 1
          %s187 = scalar_lea.sflag [#allocation5], %s186
          %s188 = sand.u32 %s42, 1
          %s189 = smul.addr %s188, 8
          %s190 = scalar_lea.vmem [#allocation4], %s189
          %192 = vsyncadd %s187, 0
          %s193 = smul.addr %s27, 8
          %s194 = scalar_lea.hbm %s0, %s193
          %s196 = sshll.u32 %s194, 4
          %s197 = int_to_ptr.hbm [resolvable:$true] %s196
          %s198 = sshll.u32 %s190, 4
          %s199 = int_to_ptr.vmem [resolvable:$true] %s198
          %201 = dma.hbm_to_vmem [thread:$0]  %s197, 128, %s199, %s187
        $region20: #{tpu_custom_call.1} parent=15 // pred_fallthru
          _
        // Predicated region
        $region21: #{tpu_custom_call.1} parent=15 // pred_check
          %p202 = pneg %p78
        $region22: #{tpu_custom_call.1} parent=15 // pred_check_branch
          %204 = sbr.rel (%p202) target = $region24
        $region23: #{tpu_custom_call.1} parent=15 // pred_region
          %s205 = sand.u32 %s68, 1
          %s206 = scalar_lea.sflag [#allocation8], %s205
          %s207 = sand.u32 %s68, 1
          %s208 = smul.addr %s207, 8
          %s209 = scalar_lea.vmem [#allocation7], %s208
          %211 = vsyncadd %s206, 0
          %s212 = smul.addr %s28, 8
          %s213 = scalar_lea.hbm %s1, %s212
          %s215 = sshll.u32 %s213, 4
          %s216 = int_to_ptr.hbm [resolvable:$true] %s215
          %s217 = sshll.u32 %s209, 4
          %s218 = int_to_ptr.vmem [resolvable:$true] %s217
          %220 = dma.hbm_to_vmem [thread:$0]  %s216, 128, %s218, %s206
        $region24: #{tpu_custom_call.1} parent=15 // pred_fallthru
          _
      $region16: #{tpu_custom_call.1} parent=5 // pred_fallthru
        _
      %p221 = scmp.le.s32.totalorder 1, %s20
      %p222 = scmp.lt.s32.totalorder %s20, 5
      %p223 = pnand %p221, %p222
      %p224 = pneg %p223
      // Predicated region
      $region25: #{tpu_custom_call.1} parent=5 // pred_check
        _
      $region26: #{tpu_custom_call.1} parent=5 // pred_check_branch
        %226 = sbr.rel (%p223) target = $region28
      $region27: #{tpu_custom_call.1} parent=5 // pred_region
        %s227 = ssub.s32 %s20, 1
        %s228 = sand.u32 %s45, 1
        %s229 = scalar_lea.sflag [#allocation5], %s228
        %s230 = sand.u32 %s45, 1
        %s231 = smul.addr %s230, 8
        %s232 = scalar_lea.vmem [#allocation4], %s231
        // Predicated region
        $region29: #{tpu_custom_call.1} parent=27 // pred_check
          %p233 = pneg %p58
        $region30: #{tpu_custom_call.1} parent=27 // pred_check_branch
          %235 = sbr.rel (%p233) target = $region32
        $region31: #{tpu_custom_call.1} parent=27 // pred_region
          %237 = dma.done %s229, 128
        $region32: #{tpu_custom_call.1} parent=27 // pred_fallthru
          _
        %s238 = sand.u32 %s71, 1
        %s239 = scalar_lea.sflag [#allocation8], %s238
        %s240 = sand.u32 %s71, 1
        %s241 = smul.addr %s240, 8
        %s242 = scalar_lea.vmem [#allocation7], %s241
        // Predicated region
        $region33: #{tpu_custom_call.1} parent=27 // pred_check
          %p243 = pneg %p84
        $region34: #{tpu_custom_call.1} parent=27 // pred_check_branch
          %245 = sbr.rel (%p243) target = $region36
        $region35: #{tpu_custom_call.1} parent=27 // pred_region
          %247 = dma.done %s239, 128
        $region36: #{tpu_custom_call.1} parent=27 // pred_fallthru
          _
        %s248 = sand.u32 %s45, 1
        %s249 = scalar_lea.sflag [#allocation5], %s248
        %s250 = sand.u32 %s45, 1
        %s251 = smul.addr %s250, 8
        %s252 = scalar_lea.vmem [#allocation4], %s251
        %p253 = pneg %p58
        %p254 = pneg %p55
        %s255 = sand.u32 %s71, 1
        %s256 = scalar_lea.sflag [#allocation8], %s255
        %s257 = sand.u32 %s71, 1
        %s258 = smul.addr %s257, 8
        %s259 = scalar_lea.vmem [#allocation7], %s258
        %p260 = pneg %p84
        %p261 = pneg %p81
        %p262 = pneg %p110
        %p263 = pneg %p107
        %p264 = scmp.lt.s32.totalorder %s29, 1
        %s265 = scalar_select %p264, %s29, 1
        %s266 = smul.addr %s265, 8
        %s267 = scalar_lea.vmem %s2, %s266
        %p268 = pneg %p136
        %p269 = pneg %p133
        %p270 = scmp.lt.s32.totalorder %s29, 1
        %s271 = scalar_select %p270, %s29, 1
        %s272 = smul.addr %s271, 8
        %s273 = scalar_lea.vmem %s3, %s272
        %p274 = pneg %p164
        %p275 = pneg %p161
        %s276 = sand.u32 %s151, 1
        %s277 = scalar_lea.sflag [#allocation6], %s276
        %s278 = sand.u32 %s151, 1
        %s279 = scalar_lea.vmem [#allocation9], %s278
        %p280 = scmp.lt.s32.totalorder %s29, 1
        %s281 = scalar_select %p280, %s29, 1
        %s282 = smul.addr %s281, 8
        %s283 = scalar_lea.vmem %s2, %s282
        %p284 = scmp.lt.s32.totalorder %s29, 1
        %s285 = scalar_select %p284, %s29, 1
        %s286 = smul.addr %s285, 8
        %s287 = scalar_lea.vmem %s3, %s286
        %v288 = vld [vmem:[%s242] sm:$0xff]
        %v289 = vmul.f32 %v288, %v288
        %vm290 = vcmask 261120
        %v291 = vsel %vm290, %v289, 0.0
        %292 = vadd.xlane.f32.xlu0 %v291
        %v293 = vpop.xlane.xlu0 %292
        %v294 = vrsqrt.pop %v293
        %v295 = vmul.f32 %v294, %v293
        %v296 = vmul.f32 %v295, %v294
        %v297 = vmul.f32 0.5, %v296
        %v298 = vsub.f32 1.5, %v297
        %v299 = vmul.f32 %v294, %v298
        %v300 = vmul.f32 %v293, %v299
        %vm301 = vcmp.eq.f32.partialorder %v293, inf
        %v302 = vsel %vm301, %v293, %v300
        %vm303 = vcmp.eq.f32.partialorder %v293, 0.0
        %v304 = vand.u32 %v293, 2147483648
        %v305 = vsel %vm303, %v304, %v302
        %v306 = vmax.f32 %v305, 1e-08
        %v307 = vrcp.pop %v306
        %v308 = vmul.f32 %v306, %v307
        %v309 = vsub.f32 1.0, %v308
        %v310 = vmul.f32 %v307, %v309
        %v311 = vadd.f32 %v307, %v310
        %vm312 = vweird.f32 %v306
        %vm313 = vweird.f32 %v307
        %vm314 = vmor %vm312, %vm313
        %v315 = vsel %vm314, %v307, %v311
        %v316 = vand.u32 2147483647, %v306
        %vm317 = vcmp.eq.f32.partialorder %v316, 8.507059e+37
        %v318 = vand.u32 %v306, 2147483648
        %v319 = vor.u32 1.1754944e-38, %v318
        %v320 = vsel %vm317, %v319, %v315
        %v321 = vmul.f32 1.0, %v320
        %v322 = vmul.f32 %v288, %v321
        %p323 = scmp.eq.s32.totalorder %s30, 0
        // Predicated region
        $region37: #{tpu_custom_call.1} parent=27 // pred_check
          %p324 = pneg %p323
        $region38: #{tpu_custom_call.1} parent=27 // pred_check_branch
          %326 = sbr.rel (%p324) target = $region40
        $region39: #{tpu_custom_call.1} parent=27 // pred_region
          %v327 = vld [vmem:[%s232] sm:$0xff]
          %v328 = vmul.f32 %v327, %v327
          %v329 = vsel %vm290, %v328, 0.0
          %330 = vadd.xlane.f32.xlu0 %v329
          %v331 = vpop.xlane.xlu0 %330
          %v332 = vrsqrt.pop %v331
          %v333 = vmul.f32 %v332, %v331
          %v334 = vmul.f32 %v333, %v332
          %v335 = vmul.f32 0.5, %v334
          %v336 = vsub.f32 1.5, %v335
          %v337 = vmul.f32 %v332, %v336
          %v338 = vmul.f32 %v331, %v337
          %vm339 = vcmp.eq.f32.partialorder %v331, inf
          %v340 = vsel %vm339, %v331, %v338
          %vm341 = vcmp.eq.f32.partialorder %v331, 0.0
          %v342 = vand.u32 %v331, 2147483648
          %v343 = vsel %vm341, %v342, %v340
          %v344 = vmax.f32 %v343, 1e-08
          %v345 = vrcp.pop %v344
          %v346 = vmul.f32 %v344, %v345
          %v347 = vsub.f32 1.0, %v346
          %v348 = vmul.f32 %v345, %v347
          %v349 = vadd.f32 %v345, %v348
          %vm350 = vweird.f32 %v344
          %vm351 = vweird.f32 %v345
          %vm352 = vmor %vm350, %vm351
          %v353 = vsel %vm352, %v345, %v349
          %v354 = vand.u32 2147483647, %v344
          %vm355 = vcmp.eq.f32.partialorder %v354, 8.507059e+37
          %v356 = vand.u32 %v344, 2147483648
          %v357 = vor.u32 1.1754944e-38, %v356
          %v358 = vsel %vm355, %v357, %v353
          %v359 = vmul.f32 1.0, %v358
          %v360 = vmul.f32 %v327, %v359
          %361 = vst.msk [vmem:[#allocation3] sm:$0xff] %vm290, %v360
          %vm362 = vcmask 7168
          %363 = vst.msk [vmem:[#allocation2] sm:$0xff] %vm362, 0.0
        $region40: #{tpu_custom_call.1} parent=27 // pred_fallthru
          _
        %v364 = vld [vmem:[#allocation3] sm:$0xff]
        %v366 = vsel %vm290, %v364, 0
        %v369 = vsel %vm290, %v322, 0
        %371 = vmatpush.xpose.msra.mxu0 0.0
        %372 = vmatpush.xpose.msra.mxu0 0.0
        %373 = vmatpush.xpose.msra.mxu0 0.0
        %374 = vmatpush.xpose.msra.mxu0 0.0
        %375 = vmatpush.xpose.msra.mxu0 0.0
        %376 = vmatpush.xpose.msra.mxu0 0.0
        %377 = vmatpush.xpose.msra.mxu0 0.0
        %378 = vmatpush.xpose.msra.mxu0 0.0
        %379 = vmatpush.xpose.msra.mxu0 0.0
        %380 = vmatpush.xpose.msra.mxu0 0.0
        %381 = vmatpush.xpose.msra.mxu0 0.0
        %382 = vmatpush.xpose.msra.mxu0 0.0
        %383 = vmatpush.xpose.msra.mxu0 0.0
        %384 = vmatpush.xpose.msra.mxu0 0.0
        %385 = vmatpush.xpose.msra.mxu0 0.0
        %386 = vmatpush.xpose.msra.mxu0 %v369
        %387 = vmatmul.f32.gmra.mxu0 %v366
        %v388 = vpop.f32.mrf.mxu0
        %v389 = vadd.f32 0.0, %v388
        %390 = vdwg.mxu0
        %v391 = vsub.f32 %v389, 1.0
        %v392 = vmul.f32 %v391, 10.0
        %v393 = vmul.f32 %v392, 1.442695
        %v394 = vpow.pop %v393
        %v395 = vld [vmem:[#allocation2] sm:$0xff]
        %vm396 = vcmask 64512
        %v397 = vsel %vm396, %v394, 0.0
        %398 = vadd.xlane.f32.xlu0 %v397
        %v399 = vpop.xlane.xlu0 %398
        %v400 = vadd.f32 %v395, %v399
        %vm401 = vcmask 7168
        %402 = vst.msk [vmem:[#allocation2] sm:$0xff] %vm401, %v400
        %v404 = vsel %vm396, 1.0, 0
        %406 = vmatpush.msra.mxu0 0.0
        %407 = vmatpush.msra.mxu0 0.0
        %408 = vmatpush.msra.mxu0 0.0
        %409 = vmatpush.msra.mxu0 0.0
        %410 = vmatpush.msra.mxu0 0.0
        %411 = vmatpush.msra.mxu0 0.0
        %412 = vmatpush.msra.mxu0 0.0
        %413 = vmatpush.msra.mxu0 0.0
        %414 = vmatpush.msra.mxu0 0.0
        %415 = vmatpush.msra.mxu0 0.0
        %416 = vmatpush.msra.mxu0 0.0
        %417 = vmatpush.msra.mxu0 0.0
        %418 = vmatpush.msra.mxu0 0.0
        %419 = vmatpush.msra.mxu0 0.0
        %420 = vmatpush.msra.mxu0 0.0
        %421 = vmatpush.msra.mxu0 %v394
        %422 = vmatmul.f32.gmra.mxu0 %v404
        %v423 = vpop.f32.mrf.mxu0
        %v424 = vadd.f32 0.0, %v423
        %425 = vdwg.mxu0
        %vm426 = vcmask 57344
        %427 = vst.msk [vmem:[%s279] sm:$0x1] %vm426, %v424
        %p428 = scmp.eq.s32.totalorder %s30, %s29
        // Predicated region
        $region41: #{tpu_custom_call.1} parent=27 // pred_check
          %p429 = pneg %p428
        $region42: #{tpu_custom_call.1} parent=27 // pred_check_branch
          %431 = sbr.rel (%p429) target = $region44
        $region43: #{tpu_custom_call.1} parent=27 // pred_region
          %v432 = vmul.f32 %v364, %v322
          %v433 = vsel %vm290, %v432, 0.0
          %434 = vadd.xlane.f32.xlu0 %v433
          %v435 = vpop.xlane.xlu0 %434
          %v436 = vmul.f32 %v435, 10.0
          %437 = vst.msk [vmem:[%s287] sm:$0xff] %vm401, %v436
        $region44: #{tpu_custom_call.1} parent=27 // pred_fallthru
          _
        %p438 = scmp.eq.s32.totalorder %s30, 1
        // Predicated region
        $region45: #{tpu_custom_call.1} parent=27 // pred_check
          %p439 = pneg %p438
        $region46: #{tpu_custom_call.1} parent=27 // pred_check_branch
          %441 = sbr.rel (%p439) target = $region48
        $region47: #{tpu_custom_call.1} parent=27 // pred_region
          %v442 = vld [vmem:[#allocation2] sm:$0xff]
          %v443 = vlog2.pop %v442
          %v444 = vmul.f32 %v443, 0.6931472
          %445 = vst.msk [vmem:[%s283] sm:$0xff] %vm401, %v444
        $region48: #{tpu_custom_call.1} parent=27 // pred_fallthru
          _
        %p446 = scmp.lt.s32.totalorder %s29, 1
        %s447 = scalar_select %p446, %s29, 1
        %s448 = smul.addr %s447, 8
        %s449 = scalar_lea.vmem %s2, %s448
        %p450 = scmp.lt.s32.totalorder %s29, 1
        %s451 = scalar_select %p450, %s29, 1
        %s452 = smul.addr %s451, 8
        %s453 = scalar_lea.vmem %s3, %s452
        %s454 = sand.u32 %s151, 1
        %s455 = scalar_lea.sflag [#allocation6], %s454
        %s456 = sand.u32 %s151, 1
        %s457 = scalar_lea.vmem [#allocation9], %s456
        // Predicated region
        $region49: #{tpu_custom_call.1} parent=27 // pred_check
          %p458 = pneg %p107
        $region50: #{tpu_custom_call.1} parent=27 // pred_check_branch
          %460 = sbr.rel (%p458) target = $region52
        $region51: #{tpu_custom_call.1} parent=27 // pred_region
          _
        $region52: #{tpu_custom_call.1} parent=27 // pred_fallthru
          _
        // Predicated region
        $region53: #{tpu_custom_call.1} parent=27 // pred_check
          %p461 = pneg %p133
        $region54: #{tpu_custom_call.1} parent=27 // pred_check_branch
          %463 = sbr.rel (%p461) target = $region56
        $region55: #{tpu_custom_call.1} parent=27 // pred_region
          _
        $region56: #{tpu_custom_call.1} parent=27 // pred_fallthru
          _
        // Predicated region
        $region57: #{tpu_custom_call.1} parent=27 // pred_check
          %p464 = pneg %p161
        $region58: #{tpu_custom_call.1} parent=27 // pred_check_branch
          %466 = sbr.rel (%p464) target = $region60
        $region59: #{tpu_custom_call.1} parent=27 // pred_region
          %468 = vsyncadd %s455, 0
          %s469 = smul.addr %s29, 2
          %s470 = sadd.s32 %s30, %s469
          %s471 = scalar_lea.hbm %s4, %s470
          %s473 = sshll.u32 %s457, 4
          %s474 = int_to_ptr.vmem [resolvable:$true] %s473
          %s475 = sshll.u32 %s471, 4
          %s476 = int_to_ptr.hbm [resolvable:$true] %s475
          %478 = dma.vmem_to_hbm [thread:$0]  %s474, 16, %s476, %s455
        $region60: #{tpu_custom_call.1} parent=27 // pred_fallthru
          _
      $region28: #{tpu_custom_call.1} parent=5 // pred_fallthru
        _
      %p479 = scmp.le.s32.totalorder 2, %s20
      // Predicated region
      $region61: #{tpu_custom_call.1} parent=5 // pred_check
        %p480 = pneg %p479
      $region62: #{tpu_custom_call.1} parent=5 // pred_check_branch
        %482 = sbr.rel (%p480) target = $region64
      $region63: #{tpu_custom_call.1} parent=5 // pred_region
        %s483 = ssub.s32 %s20, 2
        // Predicated region
        $region65: #{tpu_custom_call.1} parent=63 // pred_check
          %p484 = pneg %p113
        $region66: #{tpu_custom_call.1} parent=63 // pred_check_branch
          %486 = sbr.rel (%p484) target = $region68
        $region67: #{tpu_custom_call.1} parent=63 // pred_region
          %p487 = scmp.lt.s32.totalorder %s31, 1
          %s488 = scalar_select %p487, %s31, 1
          %s489 = smul.addr %s488, 8
          %s490 = scalar_lea.vmem %s2, %s489
        $region68: #{tpu_custom_call.1} parent=63 // pred_fallthru
          _
        // Predicated region
        $region69: #{tpu_custom_call.1} parent=63 // pred_check
          %p491 = pneg %p139
        $region70: #{tpu_custom_call.1} parent=63 // pred_check_branch
          %493 = sbr.rel (%p491) target = $region72
        $region71: #{tpu_custom_call.1} parent=63 // pred_region
          %p494 = scmp.lt.s32.totalorder %s31, 1
          %s495 = scalar_select %p494, %s31, 1
          %s496 = smul.addr %s495, 8
          %s497 = scalar_lea.vmem %s3, %s496
        $region72: #{tpu_custom_call.1} parent=63 // pred_fallthru
          _
        // Predicated region
        $region73: #{tpu_custom_call.1} parent=63 // pred_check
          %p498 = pneg %p167
        $region74: #{tpu_custom_call.1} parent=63 // pred_check_branch
          %500 = sbr.rel (%p498) target = $region76
        $region75: #{tpu_custom_call.1} parent=63 // pred_region
          %s501 = sand.u32 %s152, 1
          %s502 = scalar_lea.sflag [#allocation6], %s501
          %s503 = sand.u32 %s152, 1
          %s504 = scalar_lea.vmem [#allocation9], %s503
          %506 = dma.done %s502, 16
        $region76: #{tpu_custom_call.1} parent=63 // pred_fallthru
          _
      $region64: #{tpu_custom_call.1} parent=5 // pred_fallthru
        _
    $region6: #{tpu_custom_call.1} parent=1 // loop_footer
      %s24 = sadd.s32 1, %s20
    $region7: #{tpu_custom_call.1} parent=1 // loop_footer_branch
      %19 = sbr.rel target = $region3
    $region8: #{tpu_custom_call.1} parent=1 // loop_exit
      _
    %507 = vsyncpa [#allocation5], 1
    %s508 = scalar_lea.sflag [#allocation5], 1
    %509 = vsyncpa %s508, 1
    %510 = vsyncpa [#allocation8], 1
    %s511 = scalar_lea.sflag [#allocation8], 1
    %512 = vsyncpa %s511, 1
    %513 = vsyncpa [#allocation6], 1
    %s514 = scalar_lea.sflag [#allocation6], 1
    %515 = vsyncpa %s514, 1

</llo_original>
